<compile_context>
chip_gen: v6e
topology: v6e:2x2x1
jax: 0.10.0
libtpu: 0.0.40
codegen_flags: <defaults>
</compile_context>

<pallas_src>
import functools
from typing import NamedTuple

import numpy as np
import jax
import jax.numpy as jnp
from jax.experimental import pallas as pl
from jax.experimental.pallas import tpu as pltpu


# ----------------------------------------------------------------------------
# Parameter setup (mirrors VNG.__init__) — deterministic, plain numpy.
# ----------------------------------------------------------------------------
def calc_A_hat(adj: np.ndarray) -> np.ndarray:
    n = adj.shape[0]
    A = adj + np.eye(n, dtype=np.float64)
    D_vec = A.sum(axis=1)
    D_inv = np.diag(1.0 / D_vec)
    return A @ D_inv


def vng_compute_P(alpha: float, M_prime: np.ndarray, r: np.ndarray) -> np.ndarray:
    n = M_prime.shape[0]
    e = np.ones((n, 1), dtype=np.float64)
    return (1.0 - alpha) * M_prime.T + alpha * (e @ r.T)


def vng_power_method(U: np.ndarray, tol: float = 1e-8, max_iter: int = 5) -> np.ndarray:
    # matches torch broadcasting: (n,n) / (n,) divides each column j by row-sum[j]
    U = U / U.sum(axis=1)
    n = U.shape[0]
    phi = np.ones(n, dtype=np.float64) / n
    phi_next = phi
    for _ in range(max_iter):
        phi_next = phi @ U
        if np.abs(phi_next - phi).sum() < tol:
            break
        phi = phi_next
    return phi_next


def vng_track_pi(new_adj: np.ndarray, old_adj: np.ndarray, alpha: float,
                 r: np.ndarray, g: int) -> np.ndarray:
    M_prime = calc_A_hat(new_adj)
    P = vng_compute_P(alpha, M_prime, r)
    n = P.shape[0]
    theta = r[g:]                                  # (n-g, 1)
    e = np.ones((n - g, 1), dtype=np.float64)
    s_T = theta.T / (theta.T @ e)                  # (1, n-g)
    I = np.eye(g, dtype=np.float64)
    E = np.zeros((n, g + 1), dtype=np.float64)
    E[:g, :g] = I
    E[g:, g:] = e
    S = np.zeros((g + 1, n), dtype=np.float64)
    S[:g, :g] = I
    S[g:, g:] = s_T
    U = S @ P @ E                                  # (g+1, g+1)
    phi_T = vng_power_method(U)                    # (g+1,)
    phi_g = phi_T[:g][None, :]                     # (1, g)
    phi_s = phi_T[g] * s_T                         # (1, n-g)
    pi = np.concatenate([phi_g, phi_s], axis=1)    # (1, n)
    return pi


def build_vng_params(new_adj: np.ndarray, old_Z: np.ndarray, alpha: float, g: int):
    """Returns (pi_mat [F, N], A_hat [N, N]) as float32, like the registered buffers."""
    n_new = new_adj.shape[0]
    n_old = old_Z.shape[0]
    n_delta = n_new - n_old
    rows = []
    for i in range(old_Z.shape[1]):
        r = np.zeros((n_new, 1), dtype=np.float64)
        r[n_delta:, 0] = old_Z[:, i]
        rows.append(vng_track_pi(new_adj, new_adj, alpha, r, g))
    pi_mat = np.vstack(rows).astype(np.float32)                       # (F, N)
    A_hat = ((1.0 - alpha) * calc_A_hat(new_adj)).astype(np.float32)  # (N, N)
    return pi_mat, A_hat


# ----------------------------------------------------------------------------
# Generation-aware hardware queries
# ----------------------------------------------------------------------------
def _round_up(x: int, m: int) -> int:
    return ((x + m - 1) // m) * m


def _vmem_capacity_bytes() -> int:
    try:
        info = pltpu.get_tpu_info()
        cap = int(getattr(info, "vmem_capacity_bytes", 0) or 0)
        if cap > 0:
            return cap
    except Exception:
        pass
    return 64 << 20  # conservative fallback: fits every generation (v7x = 64 MiB)


def _node_pad_multiple() -> int:
    # v6e/v7x MXUs are 2x256^2 -> 256-aligned node (lane/K) axis; 128 on v5e.
    try:
        kind = jax.devices()[0].device_kind.lower()
        if "v5" in kind:
            return 128
    except Exception:
        pass
    return 256


# ----------------------------------------------------------------------------
# Init-time buffer preparation (padded, lane-dense, bf16 A_hat^T done ONCE)
# ----------------------------------------------------------------------------
class VNGParams(NamedTuple):
    a_t: jnp.ndarray        # (Np, Np) bf16, zero-padded ((1-alpha)*A_hat)^T
    pi_p: jnp.ndarray       # (Fp, Np) f32, zero-padded pi_mat
    n: int
    f: int
    n_pad: int
    f_pad: int
    resident: bool
    stream_tile: int
    vmem_limit_bytes: int


def prepare_vng_buffers(a_hat: np.ndarray, pi_mat: np.ndarray, *,
                        force_stream: bool = False,
                        stream_tile: int = 512) -> VNGParams:
    """Build the padded device buffers once (the __init__-time analogue of the
    module's registered buffers, but already in the kernel's working layout)."""
    N = int(a_hat.shape[0])
    F = int(pi_mat.shape[0])
    Fp = _round_up(F, 16)                 # sublane dim; 16 covers f32 & bf16 tiling

    cap = _vmem_capacity_bytes()
    lane_mult = _node_pad_multiple()
    Np_res = _round_up(N, lane_mult)
    # resident working set: A_hat^T (bf16) + 3 lane-dense f32 slabs (pi, alpha*local, out)
    resident_bytes = Np_res * Np_res * 2 + 3 * Fp * Np_res * 4
    headroom = 4 << 20
    hard_cap = cap - (2 << 20)
    resident = (not force_stream) and (resident_bytes + headroom <= hard_cap)

    if resident:
        Np = Np_res
        # no double-buffering in a grid-less call: working set + small headroom,
        # never below the most generous default scoped limit, capped < physical.
        vmem_limit = min(hard_cap, max(32 << 20, resident_bytes + headroom))
    else:
        Np = _round_up(N, stream_tile)
        tile_bytes = (stream_tile * stream_tile * 2          # A_hat^T tile (bf16)
                      + 3 * Fp * stream_tile * 4)            # preds/alocal/out tiles
        vmem_limit = min(hard_cap, max(32 << 20, 4 * tile_bytes + headroom))

    a_t_np = np.zeros((Np, Np), np.float32)
    a_t_np[:N, :N] = a_hat.T
    pi_np = np.zeros((Fp, Np), np.float32)
    pi_np[:F, :N] = pi_mat

    return VNGParams(
        a_t=jnp.asarray(a_t_np).astype(jnp.bfloat16),
        pi_p=jnp.asarray(pi_np),
        n=N, f=F, n_pad=Np, f_pad=Fp,
        resident=resident, stream_tile=int(stream_tile),
        vmem_limit_bytes=int(vmem_limit))


# ----------------------------------------------------------------------------
# Pallas kernels
# ----------------------------------------------------------------------------
def vng_prop_kernel(a_t_ref, pi_ref, alocal_ref, out_ref, *, niter: int):
    """Resident path: all operands live in VMEM; niter statically unrolled."""
    a_t = a_t_ref[...]             # (Np, Np) bf16  == ((1-alpha)*A_hat)^T, zero-padded
    alpha_local = alocal_ref[...]  # (Fp, Np) f32   == alpha * local_preds^T (hoisted)
    preds = pi_ref[...]            # (Fp, Np) f32   == pi_mat, zero-padded

    for _ in range(niter):         # compile-time unroll -> MXU/VPU interleave
        preds = jnp.dot(preds.astype(jnp.bfloat16), a_t,
                        preferred_element_type=jnp.float32) + alpha_local

    out_ref[...] = preds


def vng_stream_kernel(preds_ref, a_t_ref, alocal_ref, out_ref):
    """Streaming path (one propagation hop): grid = (j output-col tiles, k K-tiles).
    Output block resident across k -> accumulator; init with alpha*local at k==0."""
    @pl.when(pl.program_id(1) == 0)
    def _():
        out_ref[...] = alocal_ref[...]
    out_ref[...] += jnp.dot(preds_ref[...].astype(jnp.bfloat16), a_t_ref[...],
                            preferred_element_type=jnp.float32)


# ----------------------------------------------------------------------------
# Forward wrapper
# ----------------------------------------------------------------------------
def vng_forward(params: VNGParams, local_preds: jnp.ndarray, idx: jnp.ndarray,
                alpha: float, niter: int) -> jnp.ndarray:
    N, F, Np, Fp = params.n, params.f, params.n_pad, params.f_pad

    # alpha * local_preds^T, zero-padded to the lane-dense working layout.
    # (Zero padding is exact: padded rows/cols of A_hat^T are zero, so the valid
    #  [F, N] region of the recurrence is unchanged and padding stays zero.)
    alocal = jnp.zeros((Fp, Np), jnp.float32).at[:F, :N].set(
        jnp.float32(alpha) * local_preds.T)

    if params.resident:
        kernel = functools.partial(vng_prop_kernel, niter=niter)
        preds_p = pl.pallas_call(
            kernel,
            out_shape=jax.ShapeDtypeStruct((Fp, Np), jnp.float32),
            cost_estimate=pl.CostEstimate(
                flops=2 * Np * Np * Fp * niter, transcendentals=0,
                bytes_accessed=Np * Np * 2 + 3 * Fp * Np * 4),
            compiler_params=pltpu.CompilerParams(
                vmem_limit_bytes=params.vmem_limit_bytes),
        )(params.a_t, params.pi_p, alocal)
    else:
        t = params.stream_tile
        nj = Np // t
        nk = Np // t
        # A_hat^T is streamed with the default 2-deep buffering (== pl.Buffered(2));
        # the 'parallel' j axis shards output-column tiles across v7x's two TCs.
        grid_spec = pltpu.PrefetchScalarGridSpec(
            num_scalar_prefetch=0,
            grid=(nj, nk),
            in_specs=[
                pl.BlockSpec((Fp, t), lambda j, k: (0, k)),   # preds, K tiles
                pl.BlockSpec((t, t), lambda j, k: (k, j)),    # A_hat^T, streamed
                pl.BlockSpec((Fp, t), lambda j, k: (0, j)),   # alpha*local, out cols
            ],
            out_specs=pl.BlockSpec((Fp, t), lambda j, k: (0, j)),
        )
        step = pl.pallas_call(
            vng_stream_kernel,
            out_shape=jax.ShapeDtypeStruct((Fp, Np), jnp.float32),
            grid_spec=grid_spec,
            cost_estimate=pl.CostEstimate(
                flops=2 * Np * Np * Fp, transcendentals=0,
                bytes_accessed=Np * Np * 2 + 3 * Fp * Np * 4),
            compiler_params=pltpu.CompilerParams(
                dimension_semantics=("parallel", "arbitrary"),
                vmem_limit_bytes=params.vmem_limit_bytes),
        )

        @jax.jit
        def run_stream(pi_p, a_t, alocal_in):
            p = pi_p
            for _ in range(niter):
                p = step(p, a_t, alocal_in)
            return p

        preds_p = run_stream(params.pi_p, params.a_t, alocal)

    # Gather the requested node columns first (tiny (F, |idx|) block), then
    # transpose — avoids an N x F transpose of the full slab in XLA glue.
    return preds_p[:F, idx].T


# ----------------------------------------------------------------------------
# References for validation
# ----------------------------------------------------------------------------
def _references(a_hat, pi_mat, local_preds, idx, alpha, niter):
    # (1) pure-f32 numpy reference of the module's recurrence (loose tol: bf16 MXU)
    preds = pi_mat.T.astype(np.float32)
    for _ in range(niter):
        preds = a_hat @ preds + np.float32(alpha) * local_preds
    ref_f32 = preds[idx]
    # (2) jnp reference with the same bf16/f32 casting scheme as the kernel (tight tol)
    a_t = jnp.asarray(a_hat.T).astype(jnp.bfloat16)
    p = jnp.asarray(pi_mat)
    alocal = jnp.float32(alpha) * jnp.asarray(local_preds).T
    for _ in range(niter):
        p = jnp.dot(p.astype(jnp.bfloat16), a_t,
                    preferred_element_type=jnp.float32) + alocal
    ref_bf = np.asarray(jax.block_until_ready(p)).T[idx]
    return ref_f32, ref_bf


# ----------------------------------------------------------------------------
# Main
# ----------------------------------------------------------------------------
if __name__ == "__main__":
    alpha = 0.1
    niter = 5              # drop_prob=None -> dropout is identity
    # TODO(synk): MixedDropout path (drop_prob > 0) not implemented; the
    # benchmarked config uses drop_prob=None (identity), matching the module.

    key = jax.random.PRNGKey(0)
    k_adj, k_z, k_lp, k_adj2, k_pi2, k_lp2 = jax.random.split(key, 6)

    # ---- small case: full __init__ buffer construction + resident-path kernel ----
    n_new, n_old, n_feat = 16, 12, 8
    g = n_new - n_old
    upper = np.array(jax.random.uniform(k_adj, (n_new, n_new)) < 0.3, dtype=np.float64)
    upper = np.triu(upper, 1)
    new_adj = upper + upper.T

    old_Z = np.array(jax.random.uniform(k_z, (n_old, n_feat)), dtype=np.float64) + 0.1
    local_preds_np = np.array(jax.random.normal(k_lp, (n_new, n_feat)), dtype=np.float32)
    idx_np = np.array([0, 3, 7, 15], dtype=np.int32)

    pi_mat_np, A_hat_np = build_vng_params(new_adj, old_Z, alpha, g)
    params = prepare_vng_buffers(A_hat_np, pi_mat_np)          # once, at "init"

    out = vng_forward(params, jnp.asarray(local_preds_np), jnp.asarray(idx_np),
                      alpha, niter)
    out = np.asarray(jax.block_until_ready(out))

    ref_f32, ref_bf = _references(A_hat_np, pi_mat_np, local_preds_np, idx_np,
                                  alpha, niter)
    assert out.shape == (idx_np.shape[0], n_feat)
    assert np.allclose(out, ref_f32, rtol=5e-2, atol=5e-2), "resident: mismatch vs f32 ref"
    assert np.allclose(out, ref_bf, rtol=1e-2, atol=1e-2), "resident: mismatch vs bf16 ref"

    # ---- medium case: force the streaming (tiled, multi-K) path and validate ----
    n_med, f_med = 640, 8
    upper2 = np.array(jax.random.uniform(k_adj2, (n_med, n_med)) < 0.02, dtype=np.float64)
    upper2 = np.triu(upper2, 1)
    adj_med = upper2 + upper2.T
    A_hat_med = ((1.0 - alpha) * calc_A_hat(adj_med)).astype(np.float32)
    pi_med = np.array(jax.random.uniform(k_pi2, (f_med, n_med)), dtype=np.float32)
    local_med = np.array(jax.random.normal(k_lp2, (n_med, f_med)), dtype=np.float32)
    idx_med = np.array([0, 1, 17, 255, 256, 639], dtype=np.int32)

    params_med = prepare_vng_buffers(A_hat_med, pi_med,
                                     force_stream=True, stream_tile=256)
    out_med = vng_forward(params_med, jnp.asarray(local_med), jnp.asarray(idx_med),
                          alpha, niter)
    out_med = np.asarray(jax.block_until_ready(out_med))

    ref_f32_m, ref_bf_m = _references(A_hat_med, pi_med, local_med, idx_med,
                                      alpha, niter)
    assert out_med.shape == (idx_med.shape[0], f_med)
    assert np.allclose(out_med, ref_f32_m, rtol=1e-1, atol=1e-1), "stream: mismatch vs f32 ref"
    assert np.allclose(out_med, ref_bf_m, rtol=1e-2, atol=1e-2), "stream: mismatch vs bf16 ref"

    print("KERNEL_OK")
</pallas_src>

<mosaic_0001>
module attributes {stable_mosaic.version = 11 : i64} {
  func.func @vng_prop_kernel(%arg0: memref<256x256xbf16, #tpu.memory_space<vmem>>, %arg1: memref<16x256xf32, #tpu.memory_space<vmem>>, %arg2: memref<16x256xf32, #tpu.memory_space<vmem>>, %arg3: memref<16x256xf32, #tpu.memory_space<vmem>>) attributes {dimension_semantics = [], scalar_prefetch = 0 : i64, scratch_operands = 0 : i64, tpu.core_type = #tpu.core_type<tc>} {
    %c0 = arith.constant 0 : index
    %c0_0 = arith.constant 0 : index
    %0 = vector.load %arg0[%c0, %c0_0] : memref<256x256xbf16, #tpu.memory_space<vmem>>, vector<256x256xbf16>
    %c0_1 = arith.constant 0 : index
    %c0_2 = arith.constant 0 : index
    %1 = vector.load %arg2[%c0_1, %c0_2] : memref<16x256xf32, #tpu.memory_space<vmem>>, vector<16x256xf32>
    %c0_3 = arith.constant 0 : index
    %c0_4 = arith.constant 0 : index
    %2 = vector.load %arg1[%c0_3, %c0_4] : memref<16x256xf32, #tpu.memory_space<vmem>>, vector<16x256xf32>
    %3 = arith.truncf %2 : vector<16x256xf32> to vector<16x256xbf16>
    %cst = arith.constant dense<0.000000e+00> : vector<16x256xf32>
    %4 = tpu.matmul %3, %0, %cst {dimension_numbers = #tpu.dot_dimension_numbers<[1], [0], [0], [1], [0, 0, 1, 1], [], []>} : vector<16x256xbf16>, vector<256x256xbf16>, vector<16x256xf32> -> vector<16x256xf32>
    %5 = arith.addf %4, %1 : vector<16x256xf32>
    %6 = arith.truncf %5 : vector<16x256xf32> to vector<16x256xbf16>
    %cst_5 = arith.constant dense<0.000000e+00> : vector<16x256xf32>
    %7 = tpu.matmul %6, %0, %cst_5 {dimension_numbers = #tpu.dot_dimension_numbers<[1], [0], [0], [1], [0, 0, 1, 1], [], []>} : vector<16x256xbf16>, vector<256x256xbf16>, vector<16x256xf32> -> vector<16x256xf32>
    %8 = arith.addf %7, %1 : vector<16x256xf32>
    %9 = arith.truncf %8 : vector<16x256xf32> to vector<16x256xbf16>
    %cst_6 = arith.constant dense<0.000000e+00> : vector<16x256xf32>
    %10 = tpu.matmul %9, %0, %cst_6 {dimension_numbers = #tpu.dot_dimension_numbers<[1], [0], [0], [1], [0, 0, 1, 1], [], []>} : vector<16x256xbf16>, vector<256x256xbf16>, vector<16x256xf32> -> vector<16x256xf32>
    %11 = arith.addf %10, %1 : vector<16x256xf32>
    %12 = arith.truncf %11 : vector<16x256xf32> to vector<16x256xbf16>
    %cst_7 = arith.constant dense<0.000000e+00> : vector<16x256xf32>
    %13 = tpu.matmul %12, %0, %cst_7 {dimension_numbers = #tpu.dot_dimension_numbers<[1], [0], [0], [1], [0, 0, 1, 1], [], []>} : vector<16x256xbf16>, vector<256x256xbf16>, vector<16x256xf32> -> vector<16x256xf32>
    %14 = arith.addf %13, %1 : vector<16x256xf32>
    %15 = arith.truncf %14 : vector<16x256xf32> to vector<16x256xbf16>
    %cst_8 = arith.constant dense<0.000000e+00> : vector<16x256xf32>
    %16 = tpu.matmul %15, %0, %cst_8 {dimension_numbers = #tpu.dot_dimension_numbers<[1], [0], [0], [1], [0, 0, 1, 1], [], []>} : vector<16x256xbf16>, vector<256x256xbf16>, vector<16x256xf32> -> vector<16x256xf32>
    %17 = arith.addf %16, %1 : vector<16x256xf32>
    %c0_9 = arith.constant 0 : index
    %c0_10 = arith.constant 0 : index
    %18 = vector.load %arg3[%c0_9, %c0_10] : memref<16x256xf32, #tpu.memory_space<vmem>>, vector<16x256xf32>
    tpu.vector_store %arg3[%c0_9, %c0_10], %17 {strides = array<i32>} : memref<16x256xf32, #tpu.memory_space<vmem>>, vector<16x256xf32>,
    return
  }
}

</mosaic_0001>

<llo_original>
// kernel: tpu_custom_call.1
$region0: #{tpu_custom_call.1}
  #allocation0 [shape = 'u32[]', space=smem, size = 0x4, offset = 0x4, fixed_abs, tag = 'smem constant byte address 0x4 - core index']
  #allocation1 [shape = 'u32[144,128]{1,0:T(1,128)}', space=vmem, size = 0x12000, scoped, tag = 'internal scratch']
  %s0 = inlined_call_operand.hbm [shape: bf16[256,256], index: 0, kind: input, shape index: {}]
  %s1 = inlined_call_operand.hbm [shape: f32[16,256], index: 1, kind: input, shape index: {}]
  %s2 = inlined_call_operand.hbm [shape: f32[16,256], index: 2, kind: input, shape index: {}]
  %s3 = inlined_call_operand.hbm [shape: f32[16,256], index: 3, kind: output, shape index: {}]
  %s4 = sld [smem:[#allocation0]]
  $region34: #{tpu_custom_call.1} parent=0
    _
  %s6 = ssub.s32 1, %s4
  %s7 = scalar_select 0, %s6, %s4
  $region1: #{tpu_custom_call.1} parent=0
    #allocation2 [shape = 'u8[131072]{0}', space=vmem, size = 0x20000, scoped, tag = 'input window, operand 0, single buffered']
    #allocation3 [shape = 's32[1]{0}', space=sflag, size = 0x4, scoped, tag = 'scoped memory for tpu_custom_call.1']
    #allocation4 [shape = 's32[1]{0}', space=sflag, size = 0x4, scoped, tag = 'scoped memory for tpu_custom_call.1']
    #allocation5 [shape = 'u8[16384]{0}', space=vmem, size = 0x4000, scoped, tag = 'input window, operand 1, single buffered']
    #allocation6 [shape = 's32[1]{0}', space=sflag, size = 0x4, scoped, tag = 'scoped memory for tpu_custom_call.1']
    #allocation7 [shape = 'u8[16384]{0}', space=vmem, size = 0x4000, scoped, tag = 'input window, operand 2, single buffered']
    #allocation8 [shape = 'u8[16384]{0}', space=vmem, size = 0x4000, scoped, tag = 'output window, operand 0, single buffered']
    %8 = vsyncpa [#allocation3], 0
    %9 = vsyncpa [#allocation6], 0
    %10 = vsyncpa [#allocation4], 0
    // Predicated region
    $region2: #{tpu_custom_call.1} parent=1 // pred_check
      _
    $region3: #{tpu_custom_call.1} parent=1 // pred_check_branch
      %12 = sbr.rel (0) target = $region5
    $region4: #{tpu_custom_call.1} parent=1 // pred_region
      %s14 = ssub.s32 4096, 4096
      %15 = vsyncadd [#allocation3], %s14
      %s16 = sshll.u32 [#allocation2], 4
      %s17 = int_to_ptr.vmem [resolvable:$true] %s16
      %22 = dma.hbm_to_vmem [thread:$0]  %s0, 4096, %s17, [#allocation3], 128, 128, 8
    $region5: #{tpu_custom_call.1} parent=1 // pred_fallthru
      _
    // Predicated region
    $region6: #{tpu_custom_call.1} parent=1 // pred_check
      _
    $region7: #{tpu_custom_call.1} parent=1 // pred_check_branch
      %24 = sbr.rel (0) target = $region9
    $region8: #{tpu_custom_call.1} parent=1 // pred_region
      %s26 = ssub.s32 512, 512
      %27 = vsyncadd [#allocation6], %s26
      %s28 = sshll.u32 [#allocation5], 4
      %s29 = int_to_ptr.vmem [resolvable:$true] %s28
      %34 = dma.hbm_to_vmem [thread:$0]  %s1, 512, %s29, [#allocation6], 256, 256, 16
    $region9: #{tpu_custom_call.1} parent=1 // pred_fallthru
      _
    // Predicated region
    $region10: #{tpu_custom_call.1} parent=1 // pred_check
      _
    $region11: #{tpu_custom_call.1} parent=1 // pred_check_branch
      %36 = sbr.rel (0) target = $region13
    $region12: #{tpu_custom_call.1} parent=1 // pred_region
      %s38 = ssub.s32 512, 512
      %39 = vsyncadd [#allocation6], %s38
      %s40 = sshll.u32 [#allocation7], 4
      %s41 = int_to_ptr.vmem [resolvable:$true] %s40
      %46 = dma.hbm_to_vmem [thread:$0]  %s2, 512, %s41, [#allocation6], 256, 256, 16
    $region13: #{tpu_custom_call.1} parent=1 // pred_fallthru
      _
    // Predicated region
    $region14: #{tpu_custom_call.1} parent=1 // pred_check
      _
    $region15: #{tpu_custom_call.1} parent=1 // pred_check_branch
      %48 = sbr.rel (0) target = $region17
    $region16: #{tpu_custom_call.1} parent=1 // pred_region
      %49 = dma.done [#allocation3], 4096
    $region17: #{tpu_custom_call.1} parent=1 // pred_fallthru
      _
    // Predicated region
    $region18: #{tpu_custom_call.1} parent=1 // pred_check
      _
    $region19: #{tpu_custom_call.1} parent=1 // pred_check_branch
      %51 = sbr.rel (0) target = $region21
    $region20: #{tpu_custom_call.1} parent=1 // pred_region
      %52 = dma.done [#allocation6], 512
    $region21: #{tpu_custom_call.1} parent=1 // pred_fallthru
      _
    // Predicated region
    $region22: #{tpu_custom_call.1} parent=1 // pred_check
      _
    $region23: #{tpu_custom_call.1} parent=1 // pred_check_branch
      %54 = sbr.rel (0) target = $region25
    $region24: #{tpu_custom_call.1} parent=1 // pred_region
      %55 = dma.done [#allocation6], 512
    $region25: #{tpu_custom_call.1} parent=1 // pred_fallthru
      _
    %v56 = vld [vmem:[#allocation2] sm:$0xff]
    %v57 = vld [vmem:[#allocation2 + $0x8] sm:$0xff]
    %v58 = vld [vmem:[#allocation2 + $0x10] sm:$0xff]
    %v59 = vld [vmem:[#allocation2 + $0x18] sm:$0xff]
    %v60 = vld [vmem:[#allocation2 + $0x20] sm:$0xff]
    %v61 = vld [vmem:[#allocation2 + $0x28] sm:$0xff]
    %v62 = vld [vmem:[#allocation2 + $0x30] sm:$0xff]
    %v63 = vld [vmem:[#allocation2 + $0x38] sm:$0xff]
    %v64 = vld [vmem:[#allocation2 + $0x40] sm:$0xff]
    %v65 = vld [vmem:[#allocation2 + $0x48] sm:$0xff]
    %v66 = vld [vmem:[#allocation2 + $0x50] sm:$0xff]
    %v67 = vld [vmem:[#allocation2 + $0x58] sm:$0xff]
    %v68 = vld [vmem:[#allocation2 + $0x60] sm:$0xff]
    %v69 = vld [vmem:[#allocation2 + $0x68] sm:$0xff]
    %v70 = vld [vmem:[#allocation2 + $0x70] sm:$0xff]
    %v71 = vld [vmem:[#allocation2 + $0x78] sm:$0xff]
    %v72 = vld [vmem:[#allocation2 + $0x80] sm:$0xff]
    %v73 = vld [vmem:[#allocation2 + $0x88] sm:$0xff]
    %v74 = vld [vmem:[#allocation2 + $0x90] sm:$0xff]
    %v75 = vld [vmem:[#allocation2 + $0x98] sm:$0xff]
    %v76 = vld [vmem:[#allocation2 + $0xa0] sm:$0xff]
    %v77 = vld [vmem:[#allocation2 + $0xa8] sm:$0xff]
    %v78 = vld [vmem:[#allocation2 + $0xb0] sm:$0xff]
    %v79 = vld [vmem:[#allocation2 + $0xb8] sm:$0xff]
    %v80 = vld [vmem:[#allocation2 + $0xc0] sm:$0xff]
    %v81 = vld [vmem:[#allocation2 + $0xc8] sm:$0xff]
    %v82 = vld [vmem:[#allocation2 + $0xd0] sm:$0xff]
    %v83 = vld [vmem:[#allocation2 + $0xd8] sm:$0xff]
    %v84 = vld [vmem:[#allocation2 + $0xe0] sm:$0xff]
    %v85 = vld [vmem:[#allocation2 + $0xe8] sm:$0xff]
    %v86 = vld [vmem:[#allocation2 + $0xf0] sm:$0xff]
    %v87 = vld [vmem:[#allocation2 + $0xf8] sm:$0xff]
    %v88 = vld [vmem:[#allocation7] sm:$0xff]
    %v89 = vld [vmem:[#allocation7 + $0x8] sm:$0xff]
    %v90 = vld [vmem:[#allocation7 + $0x10] sm:$0xff]
    %v91 = vld [vmem:[#allocation7 + $0x18] sm:$0xff]
    %v92 = vld [vmem:[#allocation5] sm:$0xff]
    %v93 = vld [vmem:[#allocation5 + $0x8] sm:$0xff]
    %v94 = vld [vmem:[#allocation5 + $0x10] sm:$0xff]
    %v95 = vld [vmem:[#allocation5 + $0x18] sm:$0xff]
    %v96 = vpack.c.bf16 %v94, %v92
    %v97 = vpack.c.bf16 %v95, %v93
    %v130 = vunpack.c.l.b16 %v56
    %v131 = vunpack.c.h.b16 %v56
    %v132 = vunpack.c.l.b16 %v57
    %v133 = vunpack.c.h.b16 %v57
    %v134 = vunpack.c.l.b16 %v58
    %v135 = vunpack.c.h.b16 %v58
    %v136 = vunpack.c.l.b16 %v59
    %v137 = vunpack.c.h.b16 %v59
    %v138 = vunpack.c.l.b16 %v60
    %v139 = vunpack.c.h.b16 %v60
    %v140 = vunpack.c.l.b16 %v61
    %v141 = vunpack.c.h.b16 %v61
    %v142 = vunpack.c.l.b16 %v62
    %v143 = vunpack.c.h.b16 %v62
    %v144 = vunpack.c.l.b16 %v63
    %v145 = vunpack.c.h.b16 %v63
    %v146 = vunpack.c.l.b16 %v64
    %v147 = vunpack.c.h.b16 %v64
    %v148 = vunpack.c.l.b16 %v65
    %v149 = vunpack.c.h.b16 %v65
    %v150 = vunpack.c.l.b16 %v66
    %v151 = vunpack.c.h.b16 %v66
    %v152 = vunpack.c.l.b16 %v67
    %v153 = vunpack.c.h.b16 %v67
    %v154 = vunpack.c.l.b16 %v68
    %v155 = vunpack.c.h.b16 %v68
    %v156 = vunpack.c.l.b16 %v69
    %v157 = vunpack.c.h.b16 %v69
    %v158 = vunpack.c.l.b16 %v70
    %v159 = vunpack.c.h.b16 %v70
    %v160 = vunpack.c.l.b16 %v71
    %v161 = vunpack.c.h.b16 %v71
    %v162 = vunpack.c.l.b16 %v72
    %v163 = vunpack.c.h.b16 %v72
    %v164 = vunpack.c.l.b16 %v73
    %v165 = vunpack.c.h.b16 %v73
    %v166 = vunpack.c.l.b16 %v74
    %v167 = vunpack.c.h.b16 %v74
    %v168 = vunpack.c.l.b16 %v75
    %v169 = vunpack.c.h.b16 %v75
    %v170 = vunpack.c.l.b16 %v76
    %v171 = vunpack.c.h.b16 %v76
    %v172 = vunpack.c.l.b16 %v77
    %v173 = vunpack.c.h.b16 %v77
    %v174 = vunpack.c.l.b16 %v78
    %v175 = vunpack.c.h.b16 %v78
    %v176 = vunpack.c.l.b16 %v79
    %v177 = vunpack.c.h.b16 %v79
    %v178 = vunpack.c.l.b16 %v80
    %v179 = vunpack.c.h.b16 %v80
    %v180 = vunpack.c.l.b16 %v81
    %v181 = vunpack.c.h.b16 %v81
    %v182 = vunpack.c.l.b16 %v82
    %v183 = vunpack.c.h.b16 %v82
    %v184 = vunpack.c.l.b16 %v83
    %v185 = vunpack.c.h.b16 %v83
    %v186 = vunpack.c.l.b16 %v84
    %v187 = vunpack.c.h.b16 %v84
    %v188 = vunpack.c.l.b16 %v85
    %v189 = vunpack.c.h.b16 %v85
    %v190 = vunpack.c.l.b16 %v86
    %v191 = vunpack.c.h.b16 %v86
    %v192 = vunpack.c.l.b16 %v87
    %v193 = vunpack.c.h.b16 %v87
    %v194 = vpack.c.b16 %v132, %v130
    %v195 = vpack.c.b16 %v133, %v131
    %v196 = vpack.c.b16 %v136, %v134
    %v197 = vpack.c.b16 %v137, %v135
    %v198 = vpack.c.b16 %v140, %v138
    %v199 = vpack.c.b16 %v141, %v139
    %v200 = vpack.c.b16 %v144, %v142
    %v201 = vpack.c.b16 %v145, %v143
    %v202 = vpack.c.b16 %v148, %v146
    %v203 = vpack.c.b16 %v149, %v147
    %v204 = vpack.c.b16 %v152, %v150
    %v205 = vpack.c.b16 %v153, %v151
    %v206 = vpack.c.b16 %v156, %v154
    %v207 = vpack.c.b16 %v157, %v155
    %v208 = vpack.c.b16 %v160, %v158
    %v209 = vpack.c.b16 %v161, %v159
    %v210 = vpack.c.b16 %v164, %v162
    %v211 = vpack.c.b16 %v165, %v163
    %v212 = vpack.c.b16 %v168, %v166
    %v213 = vpack.c.b16 %v169, %v167
    %v214 = vpack.c.b16 %v172, %v170
    %v215 = vpack.c.b16 %v173, %v171
    %v216 = vpack.c.b16 %v176, %v174
    %v217 = vpack.c.b16 %v177, %v175
    %v218 = vpack.c.b16 %v180, %v178
    %v219 = vpack.c.b16 %v181, %v179
    %v220 = vpack.c.b16 %v184, %v182
    %v221 = vpack.c.b16 %v185, %v183
    %v222 = vpack.c.b16 %v188, %v186
    %v223 = vpack.c.b16 %v189, %v187
    %v224 = vpack.c.b16 %v192, %v190
    %v225 = vpack.c.b16 %v193, %v191
    %258 = vmatprep.subr.bf16.mxu0 %v209
    %259 = vmatpush1.bf16.msra.mxu0 %v208
    %260 = vmatprep.subr.bf16.mxu0 %v207
    %261 = vmatpush1.bf16.msra.mxu0 %v206
    %262 = vmatprep.subr.bf16.mxu0 %v205
    %263 = vmatpush1.bf16.msra.mxu0 %v204
    %264 = vmatprep.subr.bf16.mxu0 %v203
    %265 = vmatpush1.bf16.msra.mxu0 %v202
    %266 = vmatprep.subr.bf16.mxu0 %v201
    %267 = vmatpush1.bf16.msra.mxu0 %v200
    %268 = vmatprep.subr.bf16.mxu0 %v199
    %269 = vmatpush1.bf16.msra.mxu0 %v198
    %270 = vmatprep.subr.bf16.mxu0 %v197
    %271 = vmatpush1.bf16.msra.mxu0 %v196
    %272 = vmatprep.subr.bf16.mxu0 %v195
    %273 = vmatpush1.bf16.msra.mxu0 %v194
    %274 = vmatprep.subr.bf16.mxu0 %v225
    %275 = vmatpush2.bf16.msra.mxu0 %v224
    %276 = vmatprep.subr.bf16.mxu0 %v223
    %277 = vmatpush2.bf16.msra.mxu0 %v222
    %278 = vmatprep.subr.bf16.mxu0 %v221
    %279 = vmatpush2.bf16.msra.mxu0 %v220
    %280 = vmatprep.subr.bf16.mxu0 %v219
    %281 = vmatpush2.bf16.msra.mxu0 %v218
    %282 = vmatprep.subr.bf16.mxu0 %v217
    %283 = vmatpush2.bf16.msra.mxu0 %v216
    %284 = vmatprep.subr.bf16.mxu0 %v215
    %285 = vmatpush2.bf16.msra.mxu0 %v214
    %286 = vmatprep.subr.bf16.mxu0 %v213
    %287 = vmatpush2.bf16.msra.mxu0 %v212
    %288 = vmatprep.subr.bf16.mxu0 %v211
    %289 = vmatpush2.bf16.msra.mxu0 %v210
    %290 = vmatprep.mubr.bf16.mxu0 %v97
    %291 = vmatmul.mubr.bf16.gmra.mxu0 %v96
    %v292 = vpop.f32.mrf.mxu0
    %v293 = vadd.f32 %v88, %v292
    %v294 = vpop.f32.mrf.mxu0
    %v295 = vadd.f32 %v89, %v294
    %v296 = vpop.f32.mrf.mxu0
    %v297 = vadd.f32 %v90, %v296
    %v298 = vpop.f32.mrf.mxu0
    %v299 = vadd.f32 %v91, %v298
    %300 = vdwg.mxu0
    %v301 = vpack.c.bf16 %v297, %v293
    %v302 = vpack.c.bf16 %v299, %v295
    %303 = vmatprep.subr.bf16.mxu0 %v209
    %304 = vmatpush1.bf16.msra.mxu0 %v208
    %305 = vmatprep.subr.bf16.mxu0 %v207
    %306 = vmatpush1.bf16.msra.mxu0 %v206
    %307 = vmatprep.subr.bf16.mxu0 %v205
    %308 = vmatpush1.bf16.msra.mxu0 %v204
    %309 = vmatprep.subr.bf16.mxu0 %v203
    %310 = vmatpush1.bf16.msra.mxu0 %v202
    %311 = vmatprep.subr.bf16.mxu0 %v201
    %312 = vmatpush1.bf16.msra.mxu0 %v200
    %313 = vmatprep.subr.bf16.mxu0 %v199
    %314 = vmatpush1.bf16.msra.mxu0 %v198
    %315 = vmatprep.subr.bf16.mxu0 %v197
    %316 = vmatpush1.bf16.msra.mxu0 %v196
    %317 = vmatprep.subr.bf16.mxu0 %v195
    %318 = vmatpush1.bf16.msra.mxu0 %v194
    %319 = vmatprep.subr.bf16.mxu0 %v225
    %320 = vmatpush2.bf16.msra.mxu0 %v224
    %321 = vmatprep.subr.bf16.mxu0 %v223
    %322 = vmatpush2.bf16.msra.mxu0 %v222
    %323 = vmatprep.subr.bf16.mxu0 %v221
    %324 = vmatpush2.bf16.msra.mxu0 %v220
    %325 = vmatprep.subr.bf16.mxu0 %v219
    %326 = vmatpush2.bf16.msra.mxu0 %v218
    %327 = vmatprep.subr.bf16.mxu0 %v217
    %328 = vmatpush2.bf16.msra.mxu0 %v216
    %329 = vmatprep.subr.bf16.mxu0 %v215
    %330 = vmatpush2.bf16.msra.mxu0 %v214
    %331 = vmatprep.subr.bf16.mxu0 %v213
    %332 = vmatpush2.bf16.msra.mxu0 %v212
    %333 = vmatprep.subr.bf16.mxu0 %v211
    %334 = vmatpush2.bf16.msra.mxu0 %v210
    %335 = vmatprep.mubr.bf16.mxu0 %v302
    %336 = vmatmul.mubr.bf16.gmra.mxu0 %v301
    %v337 = vpop.f32.mrf.mxu0
    %v338 = vadd.f32 %v88, %v337
    %v339 = vpop.f32.mrf.mxu0
    %v340 = vadd.f32 %v89, %v339
    %v341 = vpop.f32.mrf.mxu0
    %v342 = vadd.f32 %v90, %v341
    %v343 = vpop.f32.mrf.mxu0
    %v344 = vadd.f32 %v91, %v343
    %345 = vdwg.mxu0
    %v346 = vpack.c.bf16 %v342, %v338
    %v347 = vpack.c.bf16 %v344, %v340
    %348 = vmatprep.subr.bf16.mxu0 %v209
    %349 = vmatpush1.bf16.msra.mxu0 %v208
    %350 = vmatprep.subr.bf16.mxu0 %v207
    %351 = vmatpush1.bf16.msra.mxu0 %v206
    %352 = vmatprep.subr.bf16.mxu0 %v205
    %353 = vmatpush1.bf16.msra.mxu0 %v204
    %354 = vmatprep.subr.bf16.mxu0 %v203
    %355 = vmatpush1.bf16.msra.mxu0 %v202
    %356 = vmatprep.subr.bf16.mxu0 %v201
    %357 = vmatpush1.bf16.msra.mxu0 %v200
    %358 = vmatprep.subr.bf16.mxu0 %v199
    %359 = vmatpush1.bf16.msra.mxu0 %v198
    %360 = vmatprep.subr.bf16.mxu0 %v197
    %361 = vmatpush1.bf16.msra.mxu0 %v196
    %362 = vmatprep.subr.bf16.mxu0 %v195
    %363 = vmatpush1.bf16.msra.mxu0 %v194
    %364 = vmatprep.subr.bf16.mxu0 %v225
    %365 = vmatpush2.bf16.msra.mxu0 %v224
    %366 = vmatprep.subr.bf16.mxu0 %v223
    %367 = vmatpush2.bf16.msra.mxu0 %v222
    %368 = vmatprep.subr.bf16.mxu0 %v221
    %369 = vmatpush2.bf16.msra.mxu0 %v220
    %370 = vmatprep.subr.bf16.mxu0 %v219
    %371 = vmatpush2.bf16.msra.mxu0 %v218
    %372 = vmatprep.subr.bf16.mxu0 %v217
    %373 = vmatpush2.bf16.msra.mxu0 %v216
    %374 = vmatprep.subr.bf16.mxu0 %v215
    %375 = vmatpush2.bf16.msra.mxu0 %v214
    %376 = vmatprep.subr.bf16.mxu0 %v213
    %377 = vmatpush2.bf16.msra.mxu0 %v212
    %378 = vmatprep.subr.bf16.mxu0 %v211
    %379 = vmatpush2.bf16.msra.mxu0 %v210
    %380 = vmatprep.mubr.bf16.mxu0 %v347
    %381 = vmatmul.mubr.bf16.gmra.mxu0 %v346
    %v382 = vpop.f32.mrf.mxu0
    %v383 = vadd.f32 %v88, %v382
    %v384 = vpop.f32.mrf.mxu0
    %v385 = vadd.f32 %v89, %v384
    %v386 = vpop.f32.mrf.mxu0
    %v387 = vadd.f32 %v90, %v386
    %v388 = vpop.f32.mrf.mxu0
    %v389 = vadd.f32 %v91, %v388
    %390 = vdwg.mxu0
    %v391 = vpack.c.bf16 %v387, %v383
    %v392 = vpack.c.bf16 %v389, %v385
    %393 = vmatprep.subr.bf16.mxu0 %v209
    %394 = vmatpush1.bf16.msra.mxu0 %v208
    %395 = vmatprep.subr.bf16.mxu0 %v207
    %396 = vmatpush1.bf16.msra.mxu0 %v206
    %397 = vmatprep.subr.bf16.mxu0 %v205
    %398 = vmatpush1.bf16.msra.mxu0 %v204
    %399 = vmatprep.subr.bf16.mxu0 %v203
    %400 = vmatpush1.bf16.msra.mxu0 %v202
    %401 = vmatprep.subr.bf16.mxu0 %v201
    %402 = vmatpush1.bf16.msra.mxu0 %v200
    %403 = vmatprep.subr.bf16.mxu0 %v199
    %404 = vmatpush1.bf16.msra.mxu0 %v198
    %405 = vmatprep.subr.bf16.mxu0 %v197
    %406 = vmatpush1.bf16.msra.mxu0 %v196
    %407 = vmatprep.subr.bf16.mxu0 %v195
    %408 = vmatpush1.bf16.msra.mxu0 %v194
    %409 = vmatprep.subr.bf16.mxu0 %v225
    %410 = vmatpush2.bf16.msra.mxu0 %v224
    %411 = vmatprep.subr.bf16.mxu0 %v223
    %412 = vmatpush2.bf16.msra.mxu0 %v222
    %413 = vmatprep.subr.bf16.mxu0 %v221
    %414 = vmatpush2.bf16.msra.mxu0 %v220
    %415 = vmatprep.subr.bf16.mxu0 %v219
    %416 = vmatpush2.bf16.msra.mxu0 %v218
    %417 = vmatprep.subr.bf16.mxu0 %v217
    %418 = vmatpush2.bf16.msra.mxu0 %v216
    %419 = vmatprep.subr.bf16.mxu0 %v215
    %420 = vmatpush2.bf16.msra.mxu0 %v214
    %421 = vmatprep.subr.bf16.mxu0 %v213
    %422 = vmatpush2.bf16.msra.mxu0 %v212
    %423 = vmatprep.subr.bf16.mxu0 %v211
    %424 = vmatpush2.bf16.msra.mxu0 %v210
    %425 = vmatprep.mubr.bf16.mxu0 %v392
    %426 = vmatmul.mubr.bf16.gmra.mxu0 %v391
    %v427 = vpop.f32.mrf.mxu0
    %v428 = vadd.f32 %v88, %v427
    %v429 = vpop.f32.mrf.mxu0
    %v430 = vadd.f32 %v89, %v429
    %v431 = vpop.f32.mrf.mxu0
    %v432 = vadd.f32 %v90, %v431
    %v433 = vpop.f32.mrf.mxu0
    %v434 = vadd.f32 %v91, %v433
    %435 = vdwg.mxu0
    %v436 = vpack.c.bf16 %v432, %v428
    %v437 = vpack.c.bf16 %v434, %v430
    %438 = vmatprep.subr.bf16.mxu0 %v209
    %439 = vmatpush1.bf16.msra.mxu0 %v208
    %440 = vmatprep.subr.bf16.mxu0 %v207
    %441 = vmatpush1.bf16.msra.mxu0 %v206
    %442 = vmatprep.subr.bf16.mxu0 %v205
    %443 = vmatpush1.bf16.msra.mxu0 %v204
    %444 = vmatprep.subr.bf16.mxu0 %v203
    %445 = vmatpush1.bf16.msra.mxu0 %v202
    %446 = vmatprep.subr.bf16.mxu0 %v201
    %447 = vmatpush1.bf16.msra.mxu0 %v200
    %448 = vmatprep.subr.bf16.mxu0 %v199
    %449 = vmatpush1.bf16.msra.mxu0 %v198
    %450 = vmatprep.subr.bf16.mxu0 %v197
    %451 = vmatpush1.bf16.msra.mxu0 %v196
    %452 = vmatprep.subr.bf16.mxu0 %v195
    %453 = vmatpush1.bf16.msra.mxu0 %v194
    %454 = vmatprep.subr.bf16.mxu0 %v225
    %455 = vmatpush2.bf16.msra.mxu0 %v224
    %456 = vmatprep.subr.bf16.mxu0 %v223
    %457 = vmatpush2.bf16.msra.mxu0 %v222
    %458 = vmatprep.subr.bf16.mxu0 %v221
    %459 = vmatpush2.bf16.msra.mxu0 %v220
    %460 = vmatprep.subr.bf16.mxu0 %v219
    %461 = vmatpush2.bf16.msra.mxu0 %v218
    %462 = vmatprep.subr.bf16.mxu0 %v217
    %463 = vmatpush2.bf16.msra.mxu0 %v216
    %464 = vmatprep.subr.bf16.mxu0 %v215
    %465 = vmatpush2.bf16.msra.mxu0 %v214
    %466 = vmatprep.subr.bf16.mxu0 %v213
    %467 = vmatpush2.bf16.msra.mxu0 %v212
    %468 = vmatprep.subr.bf16.mxu0 %v211
    %469 = vmatpush2.bf16.msra.mxu0 %v210
    %470 = vmatprep.mubr.bf16.mxu0 %v437
    %471 = vmatmul.mubr.bf16.gmra.mxu0 %v436
    %v472 = vpop.f32.mrf.mxu0
    %v473 = vadd.f32 %v88, %v472
    %v474 = vpop.f32.mrf.mxu0
    %v475 = vadd.f32 %v89, %v474
    %v476 = vpop.f32.mrf.mxu0
    %v477 = vadd.f32 %v90, %v476
    %v478 = vpop.f32.mrf.mxu0
    %v479 = vadd.f32 %v91, %v478
    %480 = vdwg.mxu0
    %481 = vst [vmem:[#allocation8] sm:$0xff] %v473
    %482 = vst [vmem:[#allocation8 + $0x8] sm:$0xff] %v475
    %483 = vst [vmem:[#allocation8 + $0x10] sm:$0xff] %v477
    %484 = vst [vmem:[#allocation8 + $0x18] sm:$0xff] %v479
    // Predicated region
    $region26: #{tpu_custom_call.1} parent=1 // pred_check
      _
    $region27: #{tpu_custom_call.1} parent=1 // pred_check_branch
      %486 = sbr.rel (0) target = $region29
    $region28: #{tpu_custom_call.1} parent=1 // pred_region
      %s488 = ssub.s32 512, 512
      %489 = vsyncadd [#allocation4], %s488
      %s490 = sshll.u32 [#allocation8], 4
      %s491 = int_to_ptr.vmem [resolvable:$true] %s490
      %496 = dma.vmem_to_hbm [thread:$0]  %s491, 512, %s3, [#allocation4], 256, 256, 16
    $region29: #{tpu_custom_call.1} parent=1 // pred_fallthru
      _
    // Predicated region
    $region30: #{tpu_custom_call.1} parent=1 // pred_check
      _
    $region31: #{tpu_custom_call.1} parent=1 // pred_check_branch
      %498 = sbr.rel (0) target = $region33
    $region32: #{tpu_custom_call.1} parent=1 // pred_region
      %499 = dma.done [#allocation4], 512
    $region33: #{tpu_custom_call.1} parent=1 // pred_fallthru
      _
    %500 = vsyncpa [#allocation3], 1
    %501 = vsyncpa [#allocation6], 1
    %502 = vsyncpa [#allocation4], 1

</llo_original>
